<compile_context>
chip_gen: v7x
topology: tpu7x:2x2x1
jax: 0.10.0
libtpu: 0.0.40
codegen_flags: <defaults>
</compile_context>

<pallas_src>
import jax
import jax.numpy as jnp
from jax.experimental import pallas as pl
from jax.experimental.pallas import tpu as pltpu


def _round_up(x, m):
    return ((x + m - 1) // m) * m


def _hw_defaults():
    """Generation-aware VMEM budget / lane-tile defaults."""
    kind = ""
    try:
        kind = jax.devices()[0].device_kind.lower()
    except Exception:
        pass
    vmem_cap = None
    try:
        vmem_cap = int(pltpu.get_tpu_info().vmem_capacity_bytes)
    except Exception:
        pass
    if vmem_cap is None:
        vmem_cap = (64 << 20) if "v7" in kind else (128 << 20)
    if vmem_cap <= (64 << 20):
        # v7x-class: 64 MiB per TensorCore -> leave headroom; 2 TCs to feed.
        return {"vmem_limit": 44 << 20, "t_hw": 1024, "two_cores": True}
    if "v5" in kind:
        # v5e: tile 512 already hits the HBM roofline; keep VMEM free.
        return {"vmem_limit": 96 << 20, "t_hw": 512, "two_cores": False}
    # v6e and other 128-MiB parts: big lane tiles amortize per-step overhead.
    return {"vmem_limit": 104 << 20, "t_hw": 2048, "two_cores": False}


def _make_outconv_kernel(bn, small_channels):
    def kernel(w_ref, b_ref, x_ref, o_ref, acc_ref):
        # w_ref: (tn, cin_blk)  b_ref: (tn, 1)
        # x_ref: (bn, cin_blk, tile)  o_ref / acc_ref: (bn, tn, tile)
        k = pl.program_id(3)
        nk = pl.num_programs(3)

        @pl.when(k == 0)
        def _init():
            acc_ref[...] = jnp.zeros_like(acc_ref)

        if small_channels:
            # VPU broadcast-FMA path: tiny channel counts never K-tile.
            wf = w_ref[...].astype(jnp.float32)
            cin = wf.shape[1]
            for b in range(bn):
                xf = x_ref[b].astype(jnp.float32)       # (cin, tile)
                acc = acc_ref[b]                        # (tn,  tile) f32
                for ci in range(cin):
                    acc = acc + wf[:, ci:ci + 1] * xf[ci:ci + 1, :]
                acc_ref[b] = acc
        else:
            # MXU path, f32 accumulation.
            w = w_ref[...]
            for b in range(bn):
                acc_ref[b] = acc_ref[b] + jnp.dot(
                    w, x_ref[b], preferred_element_type=jnp.float32)

        @pl.when(k == nk - 1)
        def _finalize():
            bias = b_ref[...].astype(jnp.float32)        # (tn, 1)
            o_ref[...] = (acc_ref[...] + bias[None, :, :]).astype(o_ref.dtype)

    return kernel


def outconv_pallas(x_nchw, weight, bias, *, t_hw=None, vmem_limit_bytes=None,
                   max_cin_block=None, max_cout_block=None):
    """1x1 Conv2d forward (NCHW in / NCHW out).

    x_nchw : (N, Cin, H, W)
    weight : (Cout, Cin, 1, 1)   -- PyTorch Conv2d weight layout
    bias   : (Cout,)
    """
    N, Cin, H, W = x_nchw.shape
    Cout = weight.shape[0]
    HW = H * W

    hw = _hw_defaults()
    if t_hw is None:
        t_hw = hw["t_hw"]
    if vmem_limit_bytes is None:
        vmem_limit_bytes = hw["vmem_limit"]

    # Free views only -- no NCHW<->NHWC transposes, no padding passes.
    x = x_nchw.reshape(N, Cin, HW)
    w_mat = weight.reshape(Cout, Cin)
    b_col = bias.reshape(Cout, 1)

    xb = x.dtype.itemsize
    wb = w_mat.dtype.itemsize
    ob = x.dtype.itemsize

    # Lane tile over H*W: multiple of 128, never wider than round_up(HW,128).
    t_hw = max(128, (int(t_hw) // 128) * 128)
    tile = min(t_hw, _round_up(HW, 128))

    # Images per grid step: batch small images so each x block is sizable
    # (>= ~512 KiB) instead of a handful of KB.  Cap the in-kernel unroll.
    bn = 1
    if N > 1 and _round_up(HW, 128) <= tile:
        per_image = max(1, Cin * tile * xb)
        bn = int(min(N, 16, max(1, (512 * 1024) // per_image)))

    # Cout tile: prefer the whole Cout (weights resident, x never re-read).
    tn = Cout
    if max_cout_block is not None:
        cand = int(min(Cout, max_cout_block))
        if cand == Cout or cand % 8 == 0:
            tn = cand

    # Cin (K) block: whole Cin unless it blows the VMEM budget (below).
    cin_blk = Cin
    if max_cin_block is not None:
        cand = int(min(Cin, max_cin_block))
        if cand == Cin or (cand % 128 == 0 and Cin % cand == 0):
            cin_blk = cand

    def vmem_estimate(bn_, tn_, cin_, tile_):
        return (2 * tn_ * cin_ * wb              # weight slice (dbl-buffered)
                + 2 * tn_ * 4                    # bias
                + 2 * bn_ * cin_ * tile_ * xb    # activations
                + 2 * bn_ * tn_ * tile_ * ob     # output
                + bn_ * tn_ * tile_ * 4)         # f32 accumulator scratch

    budget = int(vmem_limit_bytes * 0.9)
    for _ in range(64):
        if vmem_estimate(bn, tn, cin_blk, tile) <= budget:
            break
        if bn > 1:                               # fewer images per step
            bn = (bn + 1) // 2
        elif cin_blk % 256 == 0:                 # K-tile: keep lane tile wide
            cin_blk //= 2
        elif tn == Cout and Cout > 256:          # start tiling Cout
            tn = 256
        elif tn < Cout and tn >= 16 and tn % 16 == 0:
            tn //= 2
        elif tile > 128:                         # last resort: shrink lanes
            tile = max(128, ((tile // 2) // 128) * 128)
        else:
            break

    # v7x has 2 TensorCores: guarantee >=2 iterations along parallel axes.
    if hw["two_cores"]:
        if pl.cdiv(N, bn) * pl.cdiv(HW, tile) * pl.cdiv(Cout, tn) < 2:
            if tile >= 256:
                tile = max(128, ((tile // 2) // 128) * 128)
            elif bn > 1:
                bn = (bn + 1) // 2

    grid = (pl.cdiv(N, bn), pl.cdiv(HW, tile), pl.cdiv(Cout, tn),
            Cin // cin_blk)

    small_channels = (Cin <= 16) and (Cout <= 16)
    kernel = _make_outconv_kernel(bn, small_channels)

    out = pl.pallas_call(
        kernel,
        out_shape=jax.ShapeDtypeStruct((N, Cout, HW), x_nchw.dtype),
        grid_spec=pltpu.PrefetchScalarGridSpec(
            num_scalar_prefetch=0,
            grid=grid,
            in_specs=[
                # Weight / bias slices stay resident across N and HW tiles.
                pl.BlockSpec((tn, cin_blk), lambda n, j, co, k: (co, k)),
                pl.BlockSpec((tn, 1), lambda n, j, co, k: (co, 0)),
                # x block ignores co (co is inside the hw axis, so it is not
                # re-streamed across Cout tiles) and is lane-dense over HW.
                pl.BlockSpec((bn, cin_blk, tile), lambda n, j, co, k: (n, k, j)),
            ],
            out_specs=pl.BlockSpec((bn, tn, tile),
                                   lambda n, j, co, k: (n, co, j)),
            scratch_shapes=[pltpu.VMEM((bn, tn, tile), jnp.float32)],
        ),
        compiler_params=pltpu.CompilerParams(
            dimension_semantics=("parallel", "parallel", "parallel",
                                 "arbitrary"),
            vmem_limit_bytes=int(vmem_limit_bytes),
        ),
    )(w_mat, b_col, x)

    return out.reshape(N, Cout, H, W)


def _init_params(key, in_channels, out_channels):
    # Deterministic synthetic init (same shapes as nn.Conv2d(in, out, 1)).
    kw, kb = jax.random.split(key)
    bound = 1.0 / jnp.sqrt(in_channels)  # kernel_size = 1 -> fan_in = Cin
    weight = jax.random.uniform(
        kw, (out_channels, in_channels, 1, 1), jnp.float32, -bound, bound)
    bias = jax.random.uniform(
        kb, (out_channels,), jnp.float32, -bound, bound)
    return weight, bias


def _reference(x, weight, bias):
    cout, cin = weight.shape[0], weight.shape[1]
    return (jnp.einsum("nchw,oc->nohw", x, weight.reshape(cout, cin))
            + bias.reshape(1, cout, 1, 1))


if __name__ == "__main__":
    key = jax.random.PRNGKey(0)
    keys = jax.random.split(key, 8)

    def check(x, w, b, out, tol):
        ref = _reference(x, w, b)
        assert out.shape == ref.shape
        assert jnp.allclose(out, ref, atol=tol, rtol=tol), \
            float(jnp.max(jnp.abs(out - ref)))

    # Case 1: the module's intended tiny config (VPU path, multi-image block).
    x1 = jax.random.normal(keys[0], (2, 4, 16, 16), jnp.float32)
    w1, b1 = _init_params(keys[1], 4, 3)
    o1 = jax.block_until_ready(outconv_pallas(x1, w1, b1))
    check(x1, w1, b1, o1, 1e-5)

    # Case 2: H*W not a multiple of 128 -> ragged lane block, no pad / slice.
    x2 = jax.random.normal(keys[2], (1, 32, 20, 20), jnp.float32)
    w2, b2 = _init_params(keys[3], 32, 32)
    o2 = jax.block_until_ready(outconv_pallas(x2, w2, b2))
    check(x2, w2, b2, o2, 1e-4)

    # Case 3: forced Cin (K) tiling -> accumulator + pl.when init/finalize.
    x3 = jax.random.normal(keys[4], (2, 256, 16, 16), jnp.float32)
    w3, b3 = _init_params(keys[5], 256, 8)
    o3 = jax.block_until_ready(outconv_pallas(x3, w3, b3, max_cin_block=128))
    check(x3, w3, b3, o3, 1e-4)

    # Case 4: forced Cout tiling with a ragged Cout edge + ragged lanes.
    x4 = jax.random.normal(keys[6], (1, 16, 12, 12), jnp.float32)
    w4, b4 = _init_params(keys[7], 16, 20)
    o4 = jax.block_until_ready(outconv_pallas(x4, w4, b4, max_cout_block=16))
    check(x4, w4, b4, o4, 1e-4)

    print("KERNEL_OK")
</pallas_src>

<mosaic_0001>
module attributes {stable_mosaic.version = 11 : i64} {
  func.func @kernel(%arg0: i32, %arg1: i32, %arg2: i32, %arg3: i32, %arg4: memref<3x4xf32, #tpu.memory_space<vmem>>, %arg5: memref<3x1xf32, #tpu.memory_space<vmem>>, %arg6: memref<2x4x256xf32, #tpu.memory_space<vmem>>, %arg7: memref<2x3x256xf32, #tpu.memory_space<vmem>>, %arg8: memref<2x3x256xf32, #tpu.memory_space<vmem>>) attributes {dimension_semantics = [#tpu.dimension_semantics<parallel>, #tpu.dimension_semantics<parallel>, #tpu.dimension_semantics<parallel>, #tpu.dimension_semantics<arbitrary>], iteration_bounds = array<i64: 1, 1, 1, 1>, scalar_prefetch = 0 : i64, scratch_operands = 1 : i64, tpu.core_type = #tpu.core_type<tc>, window_params = [{transform_indices = @transform_0, window_bounds = array<i64: 3, 4>}, {transform_indices = @transform_1, window_bounds = array<i64: 3, 1>}, {transform_indices = @transform_2, window_bounds = array<i64: 2, 4, 256>}, {transform_indices = @transform_3, window_bounds = array<i64: 2, 3, 256>}]} {
    %c0_i32 = arith.constant 0 : i32
    %0 = arith.cmpi eq, %arg3, %c0_i32 : i32
    %1 = arith.extui %0 : i1 to i32
    %c0_i32_0 = arith.constant 0 : i32
    %2 = arith.cmpi ne, %1, %c0_i32_0 : i32
    scf.if %2 {
      %cst = arith.constant 0.000000e+00 : f32
      %69 = vector.broadcast %cst : f32 to vector<2x3x256xf32>
      %c0_21 = arith.constant 0 : index
      %c0_22 = arith.constant 0 : index
      %c0_23 = arith.constant 0 : index
      %70 = vector.load %arg8[%c0_21, %c0_22, %c0_23] : memref<2x3x256xf32, #tpu.memory_space<vmem>>, vector<2x3x256xf32>
      tpu.vector_store %arg8[%c0_21, %c0_22, %c0_23], %69 {strides = array<i32>} : memref<2x3x256xf32, #tpu.memory_space<vmem>>, vector<2x3x256xf32>,
    } else {
    }
    %c0 = arith.constant 0 : index
    %c0_1 = arith.constant 0 : index
    %3 = vector.load %arg4[%c0, %c0_1] : memref<3x4xf32, #tpu.memory_space<vmem>>, vector<3x4xf32>
    %c0_2 = arith.constant 0 : index
    %c0_3 = arith.constant 0 : index
    %c0_4 = arith.constant 0 : index
    %4 = vector.load %arg6[%c0_2, %c0_3, %c0_4] : memref<2x4x256xf32, #tpu.memory_space<vmem>>, vector<1x4x256xf32>
    %5 = vector.shape_cast %4 : vector<1x4x256xf32> to vector<4x256xf32>
    %c0_5 = arith.constant 0 : index
    %c0_6 = arith.constant 0 : index
    %c0_7 = arith.constant 0 : index
    %6 = vector.load %arg8[%c0_5, %c0_6, %c0_7] : memref<2x3x256xf32, #tpu.memory_space<vmem>>, vector<1x3x256xf32>
    %7 = vector.shape_cast %6 : vector<1x3x256xf32> to vector<3x256xf32>
    %8 = vector.extract_strided_slice %3 {offsets = [0, 0], sizes = [3, 1], strides = [1, 1]} : vector<3x4xf32> to vector<3x1xf32>
    %9 = vector.extract_strided_slice %5 {offsets = [0, 0], sizes = [1, 256], strides = [1, 1]} : vector<4x256xf32> to vector<1x256xf32>
    %10 = vector.broadcast %8 : vector<3x1xf32> to vector<3x256xf32>
    %11 = vector.broadcast %9 : vector<1x256xf32> to vector<3x256xf32>
    %12 = arith.mulf %10, %11 : vector<3x256xf32>
    %13 = arith.addf %7, %12 : vector<3x256xf32>
    %14 = vector.extract_strided_slice %3 {offsets = [0, 1], sizes = [3, 1], strides = [1, 1]} : vector<3x4xf32> to vector<3x1xf32>
    %15 = vector.extract_strided_slice %5 {offsets = [1, 0], sizes = [1, 256], strides = [1, 1]} : vector<4x256xf32> to vector<1x256xf32>
    %16 = vector.broadcast %14 : vector<3x1xf32> to vector<3x256xf32>
    %17 = vector.broadcast %15 : vector<1x256xf32> to vector<3x256xf32>
    %18 = arith.mulf %16, %17 : vector<3x256xf32>
    %19 = arith.addf %13, %18 : vector<3x256xf32>
    %20 = vector.extract_strided_slice %3 {offsets = [0, 2], sizes = [3, 1], strides = [1, 1]} : vector<3x4xf32> to vector<3x1xf32>
    %21 = vector.extract_strided_slice %5 {offsets = [2, 0], sizes = [1, 256], strides = [1, 1]} : vector<4x256xf32> to vector<1x256xf32>
    %22 = vector.broadcast %20 : vector<3x1xf32> to vector<3x256xf32>
    %23 = vector.broadcast %21 : vector<1x256xf32> to vector<3x256xf32>
    %24 = arith.mulf %22, %23 : vector<3x256xf32>
    %25 = arith.addf %19, %24 : vector<3x256xf32>
    %26 = vector.extract_strided_slice %3 {offsets = [0, 3], sizes = [3, 1], strides = [1, 1]} : vector<3x4xf32> to vector<3x1xf32>
    %27 = vector.extract_strided_slice %5 {offsets = [3, 0], sizes = [1, 256], strides = [1, 1]} : vector<4x256xf32> to vector<1x256xf32>
    %28 = vector.broadcast %26 : vector<3x1xf32> to vector<3x256xf32>
    %29 = vector.broadcast %27 : vector<1x256xf32> to vector<3x256xf32>
    %30 = arith.mulf %28, %29 : vector<3x256xf32>
    %31 = arith.addf %25, %30 : vector<3x256xf32>
    %c0_8 = arith.constant 0 : index
    %c0_9 = arith.constant 0 : index
    %c0_10 = arith.constant 0 : index
    %32 = vector.load %arg8[%c0_8, %c0_9, %c0_10] : memref<2x3x256xf32, #tpu.memory_space<vmem>>, vector<1x3x256xf32>
    %33 = vector.shape_cast %32 : vector<1x3x256xf32> to vector<3x256xf32>
    %34 = vector.shape_cast %31 : vector<3x256xf32> to vector<1x3x256xf32>
    tpu.vector_store %arg8[%c0_8, %c0_9, %c0_10], %34 {strides = array<i32>} : memref<2x3x256xf32, #tpu.memory_space<vmem>>, vector<1x3x256xf32>,
    %c1 = arith.constant 1 : index
    %c0_11 = arith.constant 0 : index
    %c0_12 = arith.constant 0 : index
    %35 = vector.load %arg6[%c1, %c0_11, %c0_12] : memref<2x4x256xf32, #tpu.memory_space<vmem>>, vector<1x4x256xf32>
    %36 = vector.shape_cast %35 : vector<1x4x256xf32> to vector<4x256xf32>
    %c1_13 = arith.constant 1 : index
    %c0_14 = arith.constant 0 : index
    %c0_15 = arith.constant 0 : index
    %37 = vector.load %arg8[%c1_13, %c0_14, %c0_15] : memref<2x3x256xf32, #tpu.memory_space<vmem>>, vector<1x3x256xf32>
    %38 = vector.shape_cast %37 : vector<1x3x256xf32> to vector<3x256xf32>
    %39 = vector.extract_strided_slice %3 {offsets = [0, 0], sizes = [3, 1], strides = [1, 1]} : vector<3x4xf32> to vector<3x1xf32>
    %40 = vector.extract_strided_slice %36 {offsets = [0, 0], sizes = [1, 256], strides = [1, 1]} : vector<4x256xf32> to vector<1x256xf32>
    %41 = vector.broadcast %39 : vector<3x1xf32> to vector<3x256xf32>
    %42 = vector.broadcast %40 : vector<1x256xf32> to vector<3x256xf32>
    %43 = arith.mulf %41, %42 : vector<3x256xf32>
    %44 = arith.addf %38, %43 : vector<3x256xf32>
    %45 = vector.extract_strided_slice %3 {offsets = [0, 1], sizes = [3, 1], strides = [1, 1]} : vector<3x4xf32> to vector<3x1xf32>
    %46 = vector.extract_strided_slice %36 {offsets = [1, 0], sizes = [1, 256], strides = [1, 1]} : vector<4x256xf32> to vector<1x256xf32>
    %47 = vector.broadcast %45 : vector<3x1xf32> to vector<3x256xf32>
    %48 = vector.broadcast %46 : vector<1x256xf32> to vector<3x256xf32>
    %49 = arith.mulf %47, %48 : vector<3x256xf32>
    %50 = arith.addf %44, %49 : vector<3x256xf32>
    %51 = vector.extract_strided_slice %3 {offsets = [0, 2], sizes = [3, 1], strides = [1, 1]} : vector<3x4xf32> to vector<3x1xf32>
    %52 = vector.extract_strided_slice %36 {offsets = [2, 0], sizes = [1, 256], strides = [1, 1]} : vector<4x256xf32> to vector<1x256xf32>
    %53 = vector.broadcast %51 : vector<3x1xf32> to vector<3x256xf32>
    %54 = vector.broadcast %52 : vector<1x256xf32> to vector<3x256xf32>
    %55 = arith.mulf %53, %54 : vector<3x256xf32>
    %56 = arith.addf %50, %55 : vector<3x256xf32>
    %57 = vector.extract_strided_slice %3 {offsets = [0, 3], sizes = [3, 1], strides = [1, 1]} : vector<3x4xf32> to vector<3x1xf32>
    %58 = vector.extract_strided_slice %36 {offsets = [3, 0], sizes = [1, 256], strides = [1, 1]} : vector<4x256xf32> to vector<1x256xf32>
    %59 = vector.broadcast %57 : vector<3x1xf32> to vector<3x256xf32>
    %60 = vector.broadcast %58 : vector<1x256xf32> to vector<3x256xf32>
    %61 = arith.mulf %59, %60 : vector<3x256xf32>
    %62 = arith.addf %56, %61 : vector<3x256xf32>
    %c1_16 = arith.constant 1 : index
    %c0_17 = arith.constant 0 : index
    %c0_18 = arith.constant 0 : index
    %63 = vector.load %arg8[%c1_16, %c0_17, %c0_18] : memref<2x3x256xf32, #tpu.memory_space<vmem>>, vector<1x3x256xf32>
    %64 = vector.shape_cast %63 : vector<1x3x256xf32> to vector<3x256xf32>
    %65 = vector.shape_cast %62 : vector<3x256xf32> to vector<1x3x256xf32>
    tpu.vector_store %arg8[%c1_16, %c0_17, %c0_18], %65 {strides = array<i32>} : memref<2x3x256xf32, #tpu.memory_space<vmem>>, vector<1x3x256xf32>,
    %c0_i32_19 = arith.constant 0 : i32
    %66 = arith.cmpi eq, %arg3, %c0_i32_19 : i32
    %67 = arith.extui %66 : i1 to i32
    %c0_i32_20 = arith.constant 0 : i32
    %68 = arith.cmpi ne, %67, %c0_i32_20 : i32
    scf.if %68 {
      %c0_21 = arith.constant 0 : index
      %c0_22 = arith.constant 0 : index
      %69 = vector.load %arg5[%c0_21, %c0_22] : memref<3x1xf32, #tpu.memory_space<vmem>>, vector<3x1xf32>
      %c0_23 = arith.constant 0 : index
      %c0_24 = arith.constant 0 : index
      %c0_25 = arith.constant 0 : index
      %70 = vector.load %arg8[%c0_23, %c0_24, %c0_25] : memref<2x3x256xf32, #tpu.memory_space<vmem>>, vector<2x3x256xf32>
      %71 = vector.shape_cast %69 : vector<3x1xf32> to vector<1x3x1xf32>
      %72 = vector.broadcast %71 : vector<1x3x1xf32> to vector<2x3x256xf32>
      %73 = arith.addf %70, %72 : vector<2x3x256xf32>
      %c0_26 = arith.constant 0 : index
      %c0_27 = arith.constant 0 : index
      %c0_28 = arith.constant 0 : index
      %74 = vector.load %arg7[%c0_26, %c0_27, %c0_28] : memref<2x3x256xf32, #tpu.memory_space<vmem>>, vector<2x3x256xf32>
      tpu.vector_store %arg7[%c0_26, %c0_27, %c0_28], %73 {strides = array<i32>} : memref<2x3x256xf32, #tpu.memory_space<vmem>>, vector<2x3x256xf32>,
    } else {
    }
    return
  }
  func.func @transform_0(%arg0: i32, %arg1: i32, %arg2: i32, %arg3: i32) -> (i32, i32) {
    %c0_i32 = arith.constant 0 : i32
    return %arg2, %arg3 : i32, i32
  }
  func.func @transform_1(%arg0: i32, %arg1: i32, %arg2: i32, %arg3: i32) -> (i32, i32) {
    %c0_i32 = arith.constant 0 : i32
    %c0_i32_0 = arith.constant 0 : i32
    return %arg2, %c0_i32 : i32, i32
  }
  func.func @transform_2(%arg0: i32, %arg1: i32, %arg2: i32, %arg3: i32) -> (i32, i32, i32) {
    %c0_i32 = arith.constant 0 : i32
    return %arg0, %arg3, %arg1 : i32, i32, i32
  }
  func.func @transform_3(%arg0: i32, %arg1: i32, %arg2: i32, %arg3: i32) -> (i32, i32, i32) {
    %c0_i32 = arith.constant 0 : i32
    return %arg0, %arg2, %arg1 : i32, i32, i32
  }
}

</mosaic_0001>

<llo_original>
// kernel: tpu_custom_call.1
$region0: #{tpu_custom_call.1}
  #allocation0 [shape = 'u32[]', space=smem, size = 0x4, offset = 0x4, fixed_abs, tag = 'smem constant byte address 0x4 - core index']
  #allocation1 [shape = 'u32[144,128]{1,0:T(1,128)}', space=vmem, size = 0x12000, scoped, tag = 'internal scratch']
  #allocation2 [shape = 'f32[2,3,256]{2,1,0:T(4,128)}', space=vmem, size = 0x2000, scoped, tag = 'scratch operand']
  %s0 = inlined_call_operand.hbm [shape: f32[3,4], index: 0, kind: input, shape index: {}]
  %s1 = inlined_call_operand.hbm [shape: f32[3,1], index: 1, kind: input, shape index: {}]
  %s2 = inlined_call_operand.hbm [shape: f32[2,4,256], index: 2, kind: input, shape index: {}]
  %s3 = inlined_call_operand.hbm [shape: f32[2,3,256], index: 3, kind: output, shape index: {}]
  %s4 = sld [smem:[#allocation0]]
  $region42: #{tpu_custom_call.1} parent=0
    _
  %s6 = ssub.s32 1, %s4
  %s7 = scalar_select 0, %s6, %s4
  $region1: #{tpu_custom_call.1} parent=0
    #allocation3 [shape = 'u8[2048]{0}', space=vmem, size = 0x800, scoped, tag = 'input window, operand 0, single buffered']
    #allocation4 [shape = 's32[1]{0}', space=sflag, size = 0x4, scoped, tag = 'scoped memory for tpu_custom_call.1']
    #allocation5 [shape = 's32[1]{0}', space=sflag, size = 0x4, scoped, tag = 'scoped memory for tpu_custom_call.1']
    #allocation6 [shape = 'u8[2048]{0}', space=vmem, size = 0x800, scoped, tag = 'input window, operand 1, single buffered']
    #allocation7 [shape = 's32[1]{0}', space=sflag, size = 0x4, scoped, tag = 'scoped memory for tpu_custom_call.1']
    #allocation8 [shape = 'u8[8192]{0}', space=vmem, size = 0x2000, scoped, tag = 'input window, operand 2, single buffered']
    #allocation9 [shape = 'u8[8192]{0}', space=vmem, size = 0x2000, scoped, tag = 'output window, operand 0, single buffered']
    %8 = vsyncpa [#allocation4], 0
    %9 = vsyncpa [#allocation7], 0
    %10 = vsyncpa [#allocation5], 0
    // Predicated region
    $region2: #{tpu_custom_call.1} parent=1 // pred_check
      _
    $region3: #{tpu_custom_call.1} parent=1 // pred_check_branch
      %12 = sbr.rel (0) target = $region5
    $region4: #{tpu_custom_call.1} parent=1 // pred_region
      %s14 = ssub.s32 64, 64
      %15 = vsyncadd [#allocation4], %s14
      %s17 = sshll.u32 [#allocation3], 4
      %s18 = int_to_ptr.vmem [resolvable:$true] %s17
      %20 = dma.hbm_to_vmem [thread:$0]  %s0, 64, %s18, [#allocation4]
    $region5: #{tpu_custom_call.1} parent=1 // pred_fallthru
      _
    // Predicated region
    $region6: #{tpu_custom_call.1} parent=1 // pred_check
      _
    $region7: #{tpu_custom_call.1} parent=1 // pred_check_branch
      %22 = sbr.rel (0) target = $region9
    $region8: #{tpu_custom_call.1} parent=1 // pred_region
      %s24 = ssub.s32 64, 64
      %25 = vsyncadd [#allocation7], %s24
      %s27 = sshll.u32 [#allocation6], 4
      %s28 = int_to_ptr.vmem [resolvable:$true] %s27
      %30 = dma.hbm_to_vmem [thread:$0]  %s1, 64, %s28, [#allocation7]
    $region9: #{tpu_custom_call.1} parent=1 // pred_fallthru
      _
    // Predicated region
    $region10: #{tpu_custom_call.1} parent=1 // pred_check
      _
    $region11: #{tpu_custom_call.1} parent=1 // pred_check_branch
      %32 = sbr.rel (0) target = $region13
    $region12: #{tpu_custom_call.1} parent=1 // pred_region
      %s34 = ssub.s32 256, 256
      %35 = vsyncadd [#allocation7], %s34
      %s36 = sshll.u32 [#allocation8], 4
      %s37 = int_to_ptr.vmem [resolvable:$true] %s36
      %42 = dma.hbm_to_vmem [thread:$0]  %s2, 256, %s37, [#allocation7], 128, 128, 8
    $region13: #{tpu_custom_call.1} parent=1 // pred_fallthru
      _
    // Predicated region
    $region14: #{tpu_custom_call.1} parent=1 // pred_check
      _
    $region15: #{tpu_custom_call.1} parent=1 // pred_check_branch
      %44 = sbr.rel (0) target = $region17
    $region16: #{tpu_custom_call.1} parent=1 // pred_region
      %45 = dma.done [#allocation4], 64
    $region17: #{tpu_custom_call.1} parent=1 // pred_fallthru
      _
    // Predicated region
    $region18: #{tpu_custom_call.1} parent=1 // pred_check
      _
    $region19: #{tpu_custom_call.1} parent=1 // pred_check_branch
      %47 = sbr.rel (0) target = $region21
    $region20: #{tpu_custom_call.1} parent=1 // pred_region
      %48 = dma.done [#allocation7], 64
    $region21: #{tpu_custom_call.1} parent=1 // pred_fallthru
      _
    // Predicated region
    $region22: #{tpu_custom_call.1} parent=1 // pred_check
      _
    $region23: #{tpu_custom_call.1} parent=1 // pred_check_branch
      %50 = sbr.rel (0) target = $region25
    $region24: #{tpu_custom_call.1} parent=1 // pred_region
      %51 = dma.done [#allocation7], 256
    $region25: #{tpu_custom_call.1} parent=1 // pred_fallthru
      _
    %p52 = scmp.eq.s32.totalorder 0, 0
    // Predicated region
    $region26: #{tpu_custom_call.1} parent=1 // pred_check
      %p53 = pneg %p52
    $region27: #{tpu_custom_call.1} parent=1 // pred_check_branch
      %55 = sbr.rel (%p53) target = $region29
    $region28: #{tpu_custom_call.1} parent=1 // pred_region
      %56 = vst [vmem:[#allocation2] sm:$0x77] 0.0
      %57 = vst [vmem:[#allocation2 + $0x8] sm:$0x77] 0.0
    $region29: #{tpu_custom_call.1} parent=1 // pred_fallthru
      _
    %v58 = vld [vmem:[#allocation3] sm:$0x7]
    %v59 = vld [vmem:[#allocation8] sm:$0xff]
    %v60 = vld [vmem:[#allocation2] sm:$0x77]
    %62 = vset.pattern.permute.xlu0 0
    %63 = vperm.xlu0 %62, %v58
    %v64 = vpop.permute.xlu0 %63
    %v67 = vlaneseq
    %v68 = vshrl.u32 %v67, 7
    %v69 = vsub.s32 0, %v68
    %v70 = vrot.slane %v59, %v69
    %v71 = vlaneseq
    %v72 = vshrl.u32 %v71, 7
    %v73 = vsub.s32 4, %v72
    %v74 = vrot.slane %v59, %v73
    %v77 = vlaneseq
    %v78 = vshrl.u32 %v77, 7
    %v79 = vsub.s32 0, %v78
    %v80 = vrot.slane %v70, %v79
    %v81 = vlaneseq
    %v82 = vshrl.u32 %v81, 7
    %v83 = vsub.s32 0, %v82
    %v84 = vrot.slane %v74, %v83
    %v85 = vmul.f32 %v64, %v80
    %v86 = vmul.f32 %v64, %v84
    %v89 = vcombine.low %v85, %v86
    %v91 = vadd.f32 %v60, %v89
    %92 = vset.pattern.permute.xlu0 1
    %93 = vperm.xlu0 %92, %v58
    %v94 = vpop.permute.xlu0 %93
    %v96 = vlaneseq
    %v97 = vshrl.u32 %v96, 7
    %v98 = vsub.s32 1, %v97
    %v99 = vrot.slane %v59, %v98
    %v100 = vlaneseq
    %v101 = vshrl.u32 %v100, 7
    %v102 = vsub.s32 5, %v101
    %v103 = vrot.slane %v59, %v102
    %v106 = vlaneseq
    %v107 = vshrl.u32 %v106, 7
    %v108 = vsub.s32 1, %v107
    %v109 = vrot.slane %v99, %v108
    %v110 = vlaneseq
    %v111 = vshrl.u32 %v110, 7
    %v112 = vsub.s32 1, %v111
    %v113 = vrot.slane %v103, %v112
    %v114 = vmul.f32 %v94, %v109
    %v115 = vmul.f32 %v94, %v113
    %v118 = vcombine.low %v114, %v115
    %v120 = vadd.f32 %v91, %v118
    %121 = vset.pattern.permute.xlu0 2
    %122 = vperm.xlu0 %121, %v58
    %v123 = vpop.permute.xlu0 %122
    %v125 = vlaneseq
    %v126 = vshrl.u32 %v125, 7
    %v127 = vsub.s32 2, %v126
    %v128 = vrot.slane %v59, %v127
    %v129 = vlaneseq
    %v130 = vshrl.u32 %v129, 7
    %v131 = vsub.s32 6, %v130
    %v132 = vrot.slane %v59, %v131
    %v135 = vlaneseq
    %v136 = vshrl.u32 %v135, 7
    %v137 = vsub.s32 2, %v136
    %v138 = vrot.slane %v128, %v137
    %v139 = vlaneseq
    %v140 = vshrl.u32 %v139, 7
    %v141 = vsub.s32 2, %v140
    %v142 = vrot.slane %v132, %v141
    %v143 = vmul.f32 %v123, %v138
    %v144 = vmul.f32 %v123, %v142
    %v147 = vcombine.low %v143, %v144
    %v149 = vadd.f32 %v120, %v147
    %150 = vset.pattern.permute.xlu0 3
    %151 = vperm.xlu0 %150, %v58
    %v152 = vpop.permute.xlu0 %151
    %v154 = vlaneseq
    %v155 = vshrl.u32 %v154, 7
    %v156 = vsub.s32 3, %v155
    %v157 = vrot.slane %v59, %v156
    %v158 = vlaneseq
    %v159 = vshrl.u32 %v158, 7
    %v160 = vsub.s32 7, %v159
    %v161 = vrot.slane %v59, %v160
    %v164 = vlaneseq
    %v165 = vshrl.u32 %v164, 7
    %v166 = vsub.s32 3, %v165
    %v167 = vrot.slane %v157, %v166
    %v168 = vlaneseq
    %v169 = vshrl.u32 %v168, 7
    %v170 = vsub.s32 3, %v169
    %v171 = vrot.slane %v161, %v170
    %v172 = vmul.f32 %v152, %v167
    %v173 = vmul.f32 %v152, %v171
    %v176 = vcombine.low %v172, %v173
    %v178 = vadd.f32 %v149, %v176
    %179 = vst [vmem:[#allocation2] sm:$0x77] %v178
    %s180 = scalar_lea.vmem [#allocation8], 8
    %v181 = vld [vmem:[%s180] sm:$0xff]
    %s182 = scalar_lea.vmem [#allocation2], 8
    %v183 = vld [vmem:[%s182] sm:$0x77]
    %v185 = vlaneseq
    %v186 = vshrl.u32 %v185, 7
    %v187 = vsub.s32 0, %v186
    %v188 = vrot.slane %v181, %v187
    %v189 = vlaneseq
    %v190 = vshrl.u32 %v189, 7
    %v191 = vsub.s32 4, %v190
    %v192 = vrot.slane %v181, %v191
    %v195 = vlaneseq
    %v196 = vshrl.u32 %v195, 7
    %v197 = vsub.s32 0, %v196
    %v198 = vrot.slane %v188, %v197
    %v199 = vlaneseq
    %v200 = vshrl.u32 %v199, 7
    %v201 = vsub.s32 0, %v200
    %v202 = vrot.slane %v192, %v201
    %v203 = vmul.f32 %v64, %v198
    %v204 = vmul.f32 %v64, %v202
    %v207 = vcombine.low %v203, %v204
    %v209 = vadd.f32 %v183, %v207
    %v210 = vlaneseq
    %v211 = vshrl.u32 %v210, 7
    %v212 = vsub.s32 1, %v211
    %v213 = vrot.slane %v181, %v212
    %v214 = vlaneseq
    %v215 = vshrl.u32 %v214, 7
    %v216 = vsub.s32 5, %v215
    %v217 = vrot.slane %v181, %v216
    %v220 = vlaneseq
    %v221 = vshrl.u32 %v220, 7
    %v222 = vsub.s32 1, %v221
    %v223 = vrot.slane %v213, %v222
    %v224 = vlaneseq
    %v225 = vshrl.u32 %v224, 7
    %v226 = vsub.s32 1, %v225
    %v227 = vrot.slane %v217, %v226
    %v228 = vmul.f32 %v94, %v223
    %v229 = vmul.f32 %v94, %v227
    %v232 = vcombine.low %v228, %v229
    %v234 = vadd.f32 %v209, %v232
    %v235 = vlaneseq
    %v236 = vshrl.u32 %v235, 7
    %v237 = vsub.s32 2, %v236
    %v238 = vrot.slane %v181, %v237
    %v239 = vlaneseq
    %v240 = vshrl.u32 %v239, 7
    %v241 = vsub.s32 6, %v240
    %v242 = vrot.slane %v181, %v241
    %v245 = vlaneseq
    %v246 = vshrl.u32 %v245, 7
    %v247 = vsub.s32 2, %v246
    %v248 = vrot.slane %v238, %v247
    %v249 = vlaneseq
    %v250 = vshrl.u32 %v249, 7
    %v251 = vsub.s32 2, %v250
    %v252 = vrot.slane %v242, %v251
    %v253 = vmul.f32 %v123, %v248
    %v254 = vmul.f32 %v123, %v252
    %v257 = vcombine.low %v253, %v254
    %v259 = vadd.f32 %v234, %v257
    %v260 = vlaneseq
    %v261 = vshrl.u32 %v260, 7
    %v262 = vsub.s32 3, %v261
    %v263 = vrot.slane %v181, %v262
    %v264 = vlaneseq
    %v265 = vshrl.u32 %v264, 7
    %v266 = vsub.s32 7, %v265
    %v267 = vrot.slane %v181, %v266
    %v270 = vlaneseq
    %v271 = vshrl.u32 %v270, 7
    %v272 = vsub.s32 3, %v271
    %v273 = vrot.slane %v263, %v272
    %v274 = vlaneseq
    %v275 = vshrl.u32 %v274, 7
    %v276 = vsub.s32 3, %v275
    %v277 = vrot.slane %v267, %v276
    %v278 = vmul.f32 %v152, %v273
    %v279 = vmul.f32 %v152, %v277
    %v282 = vcombine.low %v278, %v279
    %v284 = vadd.f32 %v259, %v282
    %285 = vst [vmem:[%s182] sm:$0x77] %v284
    // Predicated region
    $region30: #{tpu_custom_call.1} parent=1 // pred_check
      %p286 = pneg %p52
    $region31: #{tpu_custom_call.1} parent=1 // pred_check_branch
      %288 = sbr.rel (%p286) target = $region33
    $region32: #{tpu_custom_call.1} parent=1 // pred_region
      %v289 = vld [vmem:[#allocation6] sm:$0x7]
      %v290 = vld [vmem:[#allocation2] sm:$0x77]
      %v291 = vld [vmem:[#allocation2 + $0x8] sm:$0x77]
      %293 = vset.pattern.permute.xlu0 0
      %294 = vperm.xlu0 %293, %v289
      %v295 = vpop.permute.xlu0 %294
      %v297 = vunpack.c.l.s4 839922192
      %v298 = vunpack.c.0.s8 %v297
      %v299 = vlaneseq
      %v300 = vshrl.u32 %v299, 7
      %v301 = vsub.s32 %v298, %v300
      %v302 = vrot.slane %v295, %v301
      %v304 = vadd.f32 %v290, %v302
      %v305 = vadd.f32 %v291, %v302
      %306 = vst [vmem:[#allocation9] sm:$0x77] %v304
      %307 = vst [vmem:[#allocation9 + $0x8] sm:$0x77] %v305
    $region33: #{tpu_custom_call.1} parent=1 // pred_fallthru
      _
    // Predicated region
    $region34: #{tpu_custom_call.1} parent=1 // pred_check
      _
    $region35: #{tpu_custom_call.1} parent=1 // pred_check_branch
      %309 = sbr.rel (0) target = $region37
    $region36: #{tpu_custom_call.1} parent=1 // pred_region
      %s311 = ssub.s32 256, 256
      %312 = vsyncadd [#allocation5], %s311
      %s313 = sshll.u32 [#allocation9], 4
      %s314 = int_to_ptr.vmem [resolvable:$true] %s313
      %319 = dma.vmem_to_hbm [thread:$0]  %s314, 256, %s3, [#allocation5], 128, 128, 8
    $region37: #{tpu_custom_call.1} parent=1 // pred_fallthru
      _
    // Predicated region
    $region38: #{tpu_custom_call.1} parent=1 // pred_check
      _
    $region39: #{tpu_custom_call.1} parent=1 // pred_check_branch
      %321 = sbr.rel (0) target = $region41
    $region40: #{tpu_custom_call.1} parent=1 // pred_region
      %322 = dma.done [#allocation5], 256
    $region41: #{tpu_custom_call.1} parent=1 // pred_fallthru
      _
    %323 = vsyncpa [#allocation4], 1
    %324 = vsyncpa [#allocation7], 1
    %325 = vsyncpa [#allocation5], 1

</llo_original>
